<compile_context>
chip_gen: v7x
topology: tpu7x:2x2x1
jax: 0.10.0
libtpu: 0.0.40
codegen_flags: <defaults>
</compile_context>

<pallas_src>
import jax
import jax.numpy as jnp
from jax.experimental import pallas as pl
from jax.experimental.pallas import tpu as pltpu


def _round_up(x, m):
    return (x + m - 1) // m * m


def _pick_tile(hw_pad, batch, tm):
    """Largest multiple of 128 that divides hw_pad and is <= tm; fall back to a
    smaller divisor if that would leave fewer than 4 grid steps (v7x 2-TC)."""
    n128 = hw_pad // 128
    max_k = max(tm // 128, 1)
    divs = [d for d in range(1, n128 + 1) if n128 % d == 0 and d <= max_k]
    tile_k = max(divs)
    if batch * (n128 // tile_k) < 4:
        better = [d for d in sorted(divs, reverse=True)
                  if batch * (n128 // d) >= 4]
        tile_k = better[0] if better else min(divs)
    return tile_k * 128


# ----------------------------- Pallas kernel --------------------------------
def coordwarp_kernel(coords_ref, lat1_ref, w1c_ref, w2_ref, b2_ref,
                     w3_ref, b3_ref, o_ref):
    # coords_ref: (C, tile)   f32       positions on the lane axis
    # lat1_ref:   (hid, 1)    f32       per-batch  lat @ W1_lat^T + b1
    # w1c_ref:    (hid, C)    f32       layer-1 coord weights (VPU path)
    # w2_ref:     (hid, hid)  mxu_dtype,  b2_ref: (hid, 1) f32
    # w3_ref:     (out, hid)  mxu_dtype,  b3_ref: (out, 1) f32
    # o_ref:      (out, tile) f32       lane-dense output tile
    c = coords_ref[...]
    w1c = w1c_ref[...]

    # Layer 1 on the VPU (K = C = 2 is far too small for the MXU): unrolled
    # broadcast mul-add, lane-broadcast of per-hidden-channel scalars times a
    # sublane-broadcast coord row.
    h1 = w1c[:, 0:1] * c[0:1, :]
    for j in range(1, c.shape[0]):
        h1 = h1 + w1c[:, j:j + 1] * c[j:j + 1, :]
    h1 = jnp.maximum(h1 + lat1_ref[...], 0.0)                        # ReLU, f32

    # TODO(synk): for hid >= 512 with very large tiles, chunk the lane axis
    # with lax.fori_loop(..., unroll=True) so per-chunk h1/h2 stay in vregs.

    # Layer 2 (hid x hid) on the MXU: bf16 operands, f32 accumulation.
    h2 = jnp.dot(w2_ref[...], h1.astype(w2_ref.dtype),
                 preferred_element_type=jnp.float32)
    h2 = jnp.maximum(h2 + b2_ref[...], 0.0)                          # ReLU, f32

    # Layer 3 (out_ch x hid) on the MXU.
    # TODO(synk): if profiling shows the MXU slot still binds after the layer-1
    # change, move this M=2 matmul to VPU multiplies + an XLU sublane reduce.
    y = jnp.dot(w3_ref[...], h2.astype(w3_ref.dtype),
                preferred_element_type=jnp.float32)
    o_ref[...] = jnp.tanh(y + b3_ref[...]).astype(o_ref.dtype)       # tanh, f32


# ----------------------------- wrapper ---------------------------------------
def coordwarp_forward(coords, lat, params, *, tm=2048, mxu_dtype=jnp.bfloat16):
    """coords: (B, C, H, W), lat: (B, lat_dim) -> (B, out_ch, H, W), f32."""
    w1c, w1l, b1, w2, b2, w3, b3 = params            # PyTorch (out, in) layout
    B, C, H, W = coords.shape
    HW = H * W
    hid = w2.shape[0]
    out_ch = w3.shape[0]

    # Layer-1 latent contribution folded into a tiny per-batch bias (B, hid, 1):
    # relu(W1 @ [coords; lat] + b1) == relu(W1c @ coords + (W1l @ lat + b1)).
    lat1 = (lat.astype(jnp.float32) @ w1l.astype(jnp.float32).T
            + b1.astype(jnp.float32))[:, :, None]

    # Pad positions only to the next multiple of 128 (lane width), not to a
    # full tile; the tile is then a divisor of the padded length.
    HW_pad = _round_up(HW, 128)
    tile = _pick_tile(HW_pad, B, tm)

    coords_f = coords.reshape(B, C, HW).astype(jnp.float32)
    if HW_pad != HW:
        coords_f = jnp.pad(coords_f, ((0, 0), (0, 0), (0, HW_pad - HW)))

    grid = (B, HW_pad // tile)
    y = pl.pallas_call(
        coordwarp_kernel,
        out_shape=jax.ShapeDtypeStruct((B, out_ch, HW_pad), jnp.float32),
        grid_spec=pltpu.PrefetchScalarGridSpec(
            num_scalar_prefetch=0,
            grid=grid,
            in_specs=[
                pl.BlockSpec((None, C, tile), lambda b, i: (b, 0, i)),   # coords
                pl.BlockSpec((None, hid, 1), lambda b, i: (b, 0, 0)),    # lat1
                pl.BlockSpec((hid, C), lambda b, i: (0, 0)),             # W1_coords
                pl.BlockSpec((hid, hid), lambda b, i: (0, 0)),           # W2
                pl.BlockSpec((hid, 1), lambda b, i: (0, 0)),             # b2
                pl.BlockSpec((out_ch, hid), lambda b, i: (0, 0)),        # W3
                pl.BlockSpec((out_ch, 1), lambda b, i: (0, 0)),          # b3
            ],
            out_specs=pl.BlockSpec((None, out_ch, tile), lambda b, i: (b, 0, i)),
        ),
        compiler_params=pltpu.CompilerParams(
            dimension_semantics=("parallel", "parallel"),
            vmem_limit_bytes=48 * 1024 * 1024),
    )(coords_f, lat1,
      w1c.astype(jnp.float32),
      w2.astype(mxu_dtype),
      b2.reshape(hid, 1).astype(jnp.float32),
      w3.astype(mxu_dtype),
      b3.reshape(out_ch, 1).astype(jnp.float32))

    if HW_pad != HW:
        y = y[:, :, :HW]
    return y.reshape(B, out_ch, H, W)


# -------------------- deterministic parameter init --------------------------
def init_params(key, coord_ch, lat_dim, hid, out_ch):
    """Mimics nn.Conv1d default init U(-1/sqrt(fan_in), 1/sqrt(fan_in)).
    Weights stored in PyTorch (out, in) orientation (kernel dim squeezed);
    W1 is pre-split into its coord / latent column blocks."""
    in_ch = coord_ch + lat_dim

    def uniform(k, shape, fan_in):
        bound = 1.0 / jnp.sqrt(fan_in)
        return jax.random.uniform(k, shape, jnp.float32, -bound, bound)

    ks = jax.random.split(key, 6)
    w1 = uniform(ks[0], (hid, in_ch), in_ch)
    b1 = uniform(ks[1], (hid,), in_ch)
    w2 = uniform(ks[2], (hid, hid), hid)
    b2 = uniform(ks[3], (hid,), hid)
    w3 = uniform(ks[4], (out_ch, hid), hid)
    b3 = uniform(ks[5], (out_ch,), hid)
    return (w1[:, :coord_ch], w1[:, coord_ch:], b1, w2, b2, w3, b3)


# -------------------- pure-JAX reference (mirrors PyTorch forward) ----------
def reference_forward(coords, lat, params):
    w1c, w1l, b1, w2, b2, w3, b3 = params
    B, C, H, W = coords.shape
    HW = H * W
    w1 = jnp.concatenate([w1c, w1l], axis=1)                     # (hid, C+lat)
    coords_f = coords.reshape(B, C, HW)
    lat_b = jnp.repeat(lat[:, :, None], HW, axis=-1)             # (B, lat, HW)
    x = jnp.concatenate([coords_f, lat_b], axis=1)               # (B, C+lat, HW)
    h1 = jnp.maximum(jnp.einsum('oi,bip->bop', w1, x) + b1[None, :, None], 0.0)
    h2 = jnp.maximum(jnp.einsum('oi,bip->bop', w2, h1) + b2[None, :, None], 0.0)
    y = jnp.tanh(jnp.einsum('oi,bip->bop', w3, h2) + b3[None, :, None])
    return y.reshape(B, w3.shape[0], H, W)


if __name__ == "__main__":
    # Small shapes consistent with the module: coords channels C=2 (the module
    # views its output as (B, 2, H, W)), latent dim scaled down 512 -> 32.
    B, C, H, W = 2, 2, 16, 16
    lat_dim = 32
    hid, out_ch = lat_dim, 2

    key = jax.random.PRNGKey(0)
    k_coords, k_lat, k_params, k_coords2 = jax.random.split(key, 4)
    coords = jax.random.normal(k_coords, (B, C, H, W), jnp.float32)
    lat = jax.random.normal(k_lat, (B, lat_dim), jnp.float32)
    params = init_params(k_params, C, lat_dim, hid, out_ch)
    ref = reference_forward(coords, lat, params)

    # 1) f32-MXU path: bit-for-bit-ish check of the kernel structure.
    out_f32 = jax.block_until_ready(
        coordwarp_forward(coords, lat, params, mxu_dtype=jnp.float32))
    assert out_f32.shape == (B, out_ch, H, W)
    assert jnp.allclose(out_f32, ref, atol=1e-4, rtol=1e-4), \
        "f32 mismatch vs reference"

    # 2) non-128-multiple spatial size exercises the padded last tile / slice.
    H2 = W2 = 10
    coords2 = jax.random.normal(k_coords2, (B, C, H2, W2), jnp.float32)
    out2 = jax.block_until_ready(
        coordwarp_forward(coords2, lat, params, mxu_dtype=jnp.float32))
    ref2 = reference_forward(coords2, lat, params)
    assert out2.shape == (B, out_ch, H2, W2)
    assert jnp.allclose(out2, ref2, atol=1e-4, rtol=1e-4), "padded-tile mismatch"

    # 3) default path: bf16 MXU operands, f32 everything else (I/O stays f32).
    out_def = jax.block_until_ready(coordwarp_forward(coords, lat, params))
    assert out_def.shape == (B, out_ch, H, W)
    assert out_def.dtype == jnp.float32
    assert jnp.allclose(out_def, ref, atol=3e-2), \
        "bf16-MXU path diverged from reference"

    print("KERNEL_OK")
</pallas_src>

<mosaic_0001>
module attributes {stable_mosaic.version = 11 : i64} {
  func.func @coordwarp_kernel(%arg0: i32, %arg1: i32, %arg2: memref<1x2x128xf32, #tpu.memory_space<vmem>>, %arg3: memref<1x32x1xf32, #tpu.memory_space<vmem>>, %arg4: memref<32x2xf32, #tpu.memory_space<vmem>>, %arg5: memref<32x32xf32, #tpu.memory_space<vmem>>, %arg6: memref<32x1xf32, #tpu.memory_space<vmem>>, %arg7: memref<2x32xf32, #tpu.memory_space<vmem>>, %arg8: memref<2x1xf32, #tpu.memory_space<vmem>>, %arg9: memref<1x2x128xf32, #tpu.memory_space<vmem>>) attributes {dimension_semantics = [#tpu.dimension_semantics<parallel>, #tpu.dimension_semantics<parallel>], iteration_bounds = array<i64: 2, 2>, scalar_prefetch = 0 : i64, scratch_operands = 0 : i64, tpu.core_type = #tpu.core_type<tc>, window_params = [{transform_indices = @transform_0, window_bounds = array<i64: 1, 2, 128>}, {transform_indices = @transform_1, window_bounds = array<i64: 1, 32, 1>}, {pipeline_mode = #tpu.pipeline_mode<synchronous>, transform_indices = @transform_2, window_bounds = array<i64: 32, 2>}, {pipeline_mode = #tpu.pipeline_mode<synchronous>, transform_indices = @transform_3, window_bounds = array<i64: 32, 32>}, {pipeline_mode = #tpu.pipeline_mode<synchronous>, transform_indices = @transform_4, window_bounds = array<i64: 32, 1>}, {pipeline_mode = #tpu.pipeline_mode<synchronous>, transform_indices = @transform_5, window_bounds = array<i64: 2, 32>}, {pipeline_mode = #tpu.pipeline_mode<synchronous>, transform_indices = @transform_6, window_bounds = array<i64: 2, 1>}, {transform_indices = @transform_7, window_bounds = array<i64: 1, 2, 128>}]} {
    %c0 = arith.constant 0 : index
    %c0_0 = arith.constant 0 : index
    %c0_1 = arith.constant 0 : index
    %0 = vector.load %arg2[%c0, %c0_0, %c0_1] : memref<1x2x128xf32, #tpu.memory_space<vmem>>, vector<1x2x128xf32>
    %1 = vector.shape_cast %0 : vector<1x2x128xf32> to vector<2x128xf32>
    %c0_2 = arith.constant 0 : index
    %c0_3 = arith.constant 0 : index
    %2 = vector.load %arg4[%c0_2, %c0_3] : memref<32x2xf32, #tpu.memory_space<vmem>>, vector<32x2xf32>
    %3 = vector.extract_strided_slice %2 {offsets = [0, 0], sizes = [32, 1], strides = [1, 1]} : vector<32x2xf32> to vector<32x1xf32>
    %4 = vector.extract_strided_slice %1 {offsets = [0, 0], sizes = [1, 128], strides = [1, 1]} : vector<2x128xf32> to vector<1x128xf32>
    %5 = vector.broadcast %3 : vector<32x1xf32> to vector<32x128xf32>
    %6 = vector.broadcast %4 : vector<1x128xf32> to vector<32x128xf32>
    %7 = arith.mulf %5, %6 : vector<32x128xf32>
    %8 = vector.extract_strided_slice %2 {offsets = [0, 1], sizes = [32, 1], strides = [1, 1]} : vector<32x2xf32> to vector<32x1xf32>
    %9 = vector.extract_strided_slice %1 {offsets = [1, 0], sizes = [1, 128], strides = [1, 1]} : vector<2x128xf32> to vector<1x128xf32>
    %10 = vector.broadcast %8 : vector<32x1xf32> to vector<32x128xf32>
    %11 = vector.broadcast %9 : vector<1x128xf32> to vector<32x128xf32>
    %12 = arith.mulf %10, %11 : vector<32x128xf32>
    %13 = arith.addf %7, %12 : vector<32x128xf32>
    %c0_4 = arith.constant 0 : index
    %c0_5 = arith.constant 0 : index
    %c0_6 = arith.constant 0 : index
    %14 = vector.load %arg3[%c0_4, %c0_5, %c0_6] : memref<1x32x1xf32, #tpu.memory_space<vmem>>, vector<1x32x1xf32>
    %15 = vector.shape_cast %14 : vector<1x32x1xf32> to vector<32x1xf32>
    %16 = vector.broadcast %15 : vector<32x1xf32> to vector<32x128xf32>
    %17 = arith.addf %13, %16 : vector<32x128xf32>
    %cst = arith.constant 0.000000e+00 : f32
    %18 = vector.broadcast %cst : f32 to vector<32x128xf32>
    %19 = arith.maximumf %17, %18 : vector<32x128xf32>
    %c0_7 = arith.constant 0 : index
    %c0_8 = arith.constant 0 : index
    %20 = vector.load %arg5[%c0_7, %c0_8] : memref<32x32xf32, #tpu.memory_space<vmem>>, vector<32x32xf32>
    %cst_9 = arith.constant dense<0.000000e+00> : vector<32x128xf32>
    %21 = tpu.matmul %20, %19, %cst_9 {dimension_numbers = #tpu.dot_dimension_numbers<[1], [0], [0], [1], [0, 0, 1, 1], [], []>} : vector<32x32xf32>, vector<32x128xf32>, vector<32x128xf32> -> vector<32x128xf32>
    %c0_10 = arith.constant 0 : index
    %c0_11 = arith.constant 0 : index
    %22 = vector.load %arg6[%c0_10, %c0_11] : memref<32x1xf32, #tpu.memory_space<vmem>>, vector<32x1xf32>
    %23 = vector.broadcast %22 : vector<32x1xf32> to vector<32x128xf32>
    %24 = arith.addf %21, %23 : vector<32x128xf32>
    %cst_12 = arith.constant 0.000000e+00 : f32
    %25 = vector.broadcast %cst_12 : f32 to vector<32x128xf32>
    %26 = arith.maximumf %24, %25 : vector<32x128xf32>
    %c0_13 = arith.constant 0 : index
    %c0_14 = arith.constant 0 : index
    %27 = vector.load %arg7[%c0_13, %c0_14] : memref<2x32xf32, #tpu.memory_space<vmem>>, vector<2x32xf32>
    %cst_15 = arith.constant dense<0.000000e+00> : vector<2x128xf32>
    %28 = tpu.matmul %27, %26, %cst_15 {dimension_numbers = #tpu.dot_dimension_numbers<[1], [0], [0], [1], [0, 0, 1, 1], [], []>} : vector<2x32xf32>, vector<32x128xf32>, vector<2x128xf32> -> vector<2x128xf32>
    %c0_16 = arith.constant 0 : index
    %c0_17 = arith.constant 0 : index
    %29 = vector.load %arg8[%c0_16, %c0_17] : memref<2x1xf32, #tpu.memory_space<vmem>>, vector<2x1xf32>
    %30 = vector.broadcast %29 : vector<2x1xf32> to vector<2x128xf32>
    %31 = arith.addf %28, %30 : vector<2x128xf32>
    %32 = math.tanh %31 : vector<2x128xf32>
    %c0_18 = arith.constant 0 : index
    %c0_19 = arith.constant 0 : index
    %c0_20 = arith.constant 0 : index
    %33 = vector.load %arg9[%c0_18, %c0_19, %c0_20] : memref<1x2x128xf32, #tpu.memory_space<vmem>>, vector<1x2x128xf32>
    %34 = vector.shape_cast %33 : vector<1x2x128xf32> to vector<2x128xf32>
    %35 = vector.shape_cast %32 : vector<2x128xf32> to vector<1x2x128xf32>
    tpu.vector_store %arg9[%c0_18, %c0_19, %c0_20], %35 {strides = array<i32>} : memref<1x2x128xf32, #tpu.memory_space<vmem>>, vector<1x2x128xf32>,
    return
  }
  func.func @transform_0(%arg0: i32, %arg1: i32) -> (i32, i32, i32) {
    %c0_i32 = arith.constant 0 : i32
    %c0_i32_0 = arith.constant 0 : i32
    return %arg0, %c0_i32, %arg1 : i32, i32, i32
  }
  func.func @transform_1(%arg0: i32, %arg1: i32) -> (i32, i32, i32) {
    %c0_i32 = arith.constant 0 : i32
    %c0_i32_0 = arith.constant 0 : i32
    %c0_i32_1 = arith.constant 0 : i32
    return %arg0, %c0_i32, %c0_i32_0 : i32, i32, i32
  }
  func.func @transform_2(%arg0: i32, %arg1: i32) -> (i32, i32) {
    %c0_i32 = arith.constant 0 : i32
    %c0_i32_0 = arith.constant 0 : i32
    %c0_i32_1 = arith.constant 0 : i32
    return %c0_i32, %c0_i32_0 : i32, i32
  }
  func.func @transform_3(%arg0: i32, %arg1: i32) -> (i32, i32) {
    %c0_i32 = arith.constant 0 : i32
    %c0_i32_0 = arith.constant 0 : i32
    %c0_i32_1 = arith.constant 0 : i32
    return %c0_i32, %c0_i32_0 : i32, i32
  }
  func.func @transform_4(%arg0: i32, %arg1: i32) -> (i32, i32) {
    %c0_i32 = arith.constant 0 : i32
    %c0_i32_0 = arith.constant 0 : i32
    %c0_i32_1 = arith.constant 0 : i32
    return %c0_i32, %c0_i32_0 : i32, i32
  }
  func.func @transform_5(%arg0: i32, %arg1: i32) -> (i32, i32) {
    %c0_i32 = arith.constant 0 : i32
    %c0_i32_0 = arith.constant 0 : i32
    %c0_i32_1 = arith.constant 0 : i32
    return %c0_i32, %c0_i32_0 : i32, i32
  }
  func.func @transform_6(%arg0: i32, %arg1: i32) -> (i32, i32) {
    %c0_i32 = arith.constant 0 : i32
    %c0_i32_0 = arith.constant 0 : i32
    %c0_i32_1 = arith.constant 0 : i32
    return %c0_i32, %c0_i32_0 : i32, i32
  }
  func.func @transform_7(%arg0: i32, %arg1: i32) -> (i32, i32, i32) {
    %c0_i32 = arith.constant 0 : i32
    %c0_i32_0 = arith.constant 0 : i32
    return %arg0, %c0_i32, %arg1 : i32, i32, i32
  }
}

</mosaic_0001>

<llo_original>
// kernel: tpu_custom_call.1
$region0: #{tpu_custom_call.1}
  #allocation0 [shape = 'u32[]', space=smem, size = 0x4, offset = 0x4, fixed_abs, tag = 'smem constant byte address 0x4 - core index']
  #allocation1 [shape = 'u32[144,128]{1,0:T(1,128)}', space=vmem, size = 0x12000, scoped, tag = 'internal scratch']
  %s0 = inlined_call_operand.vmem [shape: f32[2,2,256], index: 0, kind: input, shape index: {}]
  %s1 = inlined_call_operand.vmem [shape: f32[2,32,1], index: 1, kind: input, shape index: {}]
  %s2 = inlined_call_operand.vmem [shape: f32[32,2], index: 2, kind: input, shape index: {}]
  %s3 = inlined_call_operand.vmem [shape: f32[32,32], index: 3, kind: input, shape index: {}]
  %s4 = inlined_call_operand.vmem [shape: f32[32,1], index: 4, kind: input, shape index: {}]
  %s5 = inlined_call_operand.vmem [shape: f32[2,32], index: 5, kind: input, shape index: {}]
  %s6 = inlined_call_operand.vmem [shape: f32[2,1], index: 6, kind: input, shape index: {}]
  %s7 = inlined_call_operand.hbm [shape: f32[2,2,256], index: 7, kind: output, shape index: {}]
  %s8 = sld [smem:[#allocation0]]
  $region61: #{tpu_custom_call.1} parent=0
    _
  %s10 = ssub.s32 1, %s8
  %s11 = scalar_select 0, %s10, %s8
  $region1: #{tpu_custom_call.1} parent=0
    #allocation2 [shape = 'u8[2048]{0}', space=vmem, size = 0x800, scoped, tag = 'output window, operand 0']
    #allocation3 [shape = 's32[2]{0}', space=sflag, size = 0x8, scoped, tag = 'scoped memory for tpu_custom_call.1']
    %12 = vsyncpa [#allocation3], 0
    %s13 = scalar_lea.sflag [#allocation3], 1
    %14 = vsyncpa %s13, 0
    loop: start=0, step=1, limit=6
    $region2: #{tpu_custom_call.1} parent=1 // loop_pre_header
      _
    $region3: #{tpu_custom_call.1} parent=1 // loop_header
      %s16 = sphi 0, %s20
      %p17 = scmp.ge.s32.totalorder %s16, 6
      %s23 = sphi 0, %s35
      %s24 = sphi 0, %s31
      %s25 = sphi 0, %s23
      %s26 = sphi 0, %s24
      %s27 = sphi 0, %s25
      %s28 = sphi 0, %s26
      %s40 = sphi 0, %s42
      %s43 = sphi 0, %s40
      %s44 = sphi 0, %s43
      %s60 = sphi 0, %s44
      %s66 = sphi 0, %s68
      %s69 = sphi 0, %s66
      %s70 = sphi 0, %s69
      %s86 = sphi 0, %s70
      %s90 = sphi 0, %s90
      %s92 = sphi 0, %s90
      %s93 = sphi 0, %s92
      %s107 = sphi 0, %s93
      %s111 = sphi 0, %s111
      %s113 = sphi 0, %s111
      %s114 = sphi 0, %s113
      %s128 = sphi 0, %s114
      %s132 = sphi 0, %s132
      %s134 = sphi 0, %s132
      %s135 = sphi 0, %s134
      %s149 = sphi 0, %s135
      %s153 = sphi 0, %s153
      %s155 = sphi 0, %s153
      %s156 = sphi 0, %s155
      %s170 = sphi 0, %s156
      %s174 = sphi 0, %s174
      %s176 = sphi 0, %s174
      %s177 = sphi 0, %s176
      %s191 = sphi 0, %s177
      %s199 = sphi 0, %s201
      %s202 = sphi 0, %s199
      %s203 = sphi 0, %s202
      %s219 = sphi 0, %s203
    $region4: #{tpu_custom_call.1} parent=1 // loop_header_branch
      %19 = sbr.rel (%p17) target = $region8
    $region5: #{tpu_custom_call.1} parent=1 // loop_body
      %s21 = ssub.s32 %s16, 1
      %s22 = ssub.s32 %s16, 2
      %s29 = sadd.s32 1, %s24
      %p30 = scmp.ge.s32.totalorder %s29, 2
      %s31 = scalar_select %p30, 0, %s29
      %s32 = sadd.s32 1, %s23
      %s33 = scalar_select %p30, %s32, %s23
      %p34 = scmp.ge.s32.totalorder %s33, 2
      %s35 = scalar_select %p34, 0, %s33
      %s36 = ssub.s32 %s23, %s35
      %s37 = ssub.s32 %s24, %s31
      %s38 = sor.u32 %s36, %s37
      %p39 = scmp.eq.s32.totalorder %s38, 0
      %s41 = sadd.s32 %s40, 1
      %s42 = scalar_select %p39, %s40, %s41
      %p45 = pneg %p39
      %p46 = scmp.eq.s32.totalorder %s16, 3
      %p47 = por %p45, %p46
      %p48 = scmp.ne.s32.totalorder %s40, %s43
      %p49 = scmp.eq.s32.totalorder %s16, 0
      %p50 = por %p48, %p49
      %p51 = scmp.ne.s32.totalorder %s40, %s43
      %p52 = scmp.eq.s32.totalorder %s21, 3
      %p53 = por %p51, %p52
      %p54 = scmp.ne.s32.totalorder %s43, %s44
      %p55 = scmp.eq.s32.totalorder %s21, 0
      %p56 = por %p54, %p55
      %p57 = scmp.ne.s32.totalorder %s43, %s44
      %p58 = scmp.eq.s32.totalorder %s22, 3
      %p59 = por %p57, %p58
      %p61 = scmp.ne.s32.totalorder %s44, %s60
      %p62 = scmp.eq.s32.totalorder %s22, 0
      %p63 = por %p61, %p62
      %s64 = ssub.s32 %s23, %s35
      %p65 = scmp.eq.s32.totalorder %s64, 0
      %s67 = sadd.s32 %s66, 1
      %s68 = scalar_select %p65, %s66, %s67
      %p71 = pneg %p65
      %p72 = scmp.eq.s32.totalorder %s16, 3
      %p73 = por %p71, %p72
      %p74 = scmp.ne.s32.totalorder %s66, %s69
      %p75 = scmp.eq.s32.totalorder %s16, 0
      %p76 = por %p74, %p75
      %p77 = scmp.ne.s32.totalorder %s66, %s69
      %p78 = scmp.eq.s32.totalorder %s21, 3
      %p79 = por %p77, %p78
      %p80 = scmp.ne.s32.totalorder %s69, %s70
      %p81 = scmp.eq.s32.totalorder %s21, 0
      %p82 = por %p80, %p81
      %p83 = scmp.ne.s32.totalorder %s69, %s70
      %p84 = scmp.eq.s32.totalorder %s22, 3
      %p85 = por %p83, %p84
      %p87 = scmp.ne.s32.totalorder %s70, %s86
      %p88 = scmp.eq.s32.totalorder %s22, 0
      %p89 = por %p87, %p88
      %s91 = sadd.s32 %s90, 1
      %p94 = scmp.eq.s32.totalorder %s16, 3
      %p95 = scmp.ne.s32.totalorder %s90, %s92
      %p96 = scmp.eq.s32.totalorder %s16, 0
      %p97 = por %p95, %p96
      %p98 = scmp.ne.s32.totalorder %s90, %s92
      %p99 = scmp.eq.s32.totalorder %s21, 3
      %p100 = por %p98, %p99
      %p101 = scmp.ne.s32.totalorder %s92, %s93
      %p102 = scmp.eq.s32.totalorder %s21, 0
      %p103 = por %p101, %p102
      %p104 = scmp.ne.s32.totalorder %s92, %s93
      %p105 = scmp.eq.s32.totalorder %s22, 3
      %p106 = por %p104, %p105
      %p108 = scmp.ne.s32.totalorder %s93, %s107
      %p109 = scmp.eq.s32.totalorder %s22, 0
      %p110 = por %p108, %p109
      %s112 = sadd.s32 %s111, 1
      %p115 = scmp.eq.s32.totalorder %s16, 3
      %p116 = scmp.ne.s32.totalorder %s111, %s113
      %p117 = scmp.eq.s32.totalorder %s16, 0
      %p118 = por %p116, %p117
      %p119 = scmp.ne.s32.totalorder %s111, %s113
      %p120 = scmp.eq.s32.totalorder %s21, 3
      %p121 = por %p119, %p120
      %p122 = scmp.ne.s32.totalorder %s113, %s114
      %p123 = scmp.eq.s32.totalorder %s21, 0
      %p124 = por %p122, %p123
      %p125 = scmp.ne.s32.totalorder %s113, %s114
      %p126 = scmp.eq.s32.totalorder %s22, 3
      %p127 = por %p125, %p126
      %p129 = scmp.ne.s32.totalorder %s114, %s128
      %p130 = scmp.eq.s32.totalorder %s22, 0
      %p131 = por %p129, %p130
      %s133 = sadd.s32 %s132, 1
      %p136 = scmp.eq.s32.totalorder %s16, 3
      %p137 = scmp.ne.s32.totalorder %s132, %s134
      %p138 = scmp.eq.s32.totalorder %s16, 0
      %p139 = por %p137, %p138
      %p140 = scmp.ne.s32.totalorder %s132, %s134
      %p141 = scmp.eq.s32.totalorder %s21, 3
      %p142 = por %p140, %p141
      %p143 = scmp.ne.s32.totalorder %s134, %s135
      %p144 = scmp.eq.s32.totalorder %s21, 0
      %p145 = por %p143, %p144
      %p146 = scmp.ne.s32.totalorder %s134, %s135
      %p147 = scmp.eq.s32.totalorder %s22, 3
      %p148 = por %p146, %p147
      %p150 = scmp.ne.s32.totalorder %s135, %s149
      %p151 = scmp.eq.s32.totalorder %s22, 0
      %p152 = por %p150, %p151
      %s154 = sadd.s32 %s153, 1
      %p157 = scmp.eq.s32.totalorder %s16, 3
      %p158 = scmp.ne.s32.totalorder %s153, %s155
      %p159 = scmp.eq.s32.totalorder %s16, 0
      %p160 = por %p158, %p159
      %p161 = scmp.ne.s32.totalorder %s153, %s155
      %p162 = scmp.eq.s32.totalorder %s21, 3
      %p163 = por %p161, %p162
      %p164 = scmp.ne.s32.totalorder %s155, %s156
      %p165 = scmp.eq.s32.totalorder %s21, 0
      %p166 = por %p164, %p165
      %p167 = scmp.ne.s32.totalorder %s155, %s156
      %p168 = scmp.eq.s32.totalorder %s22, 3
      %p169 = por %p167, %p168
      %p171 = scmp.ne.s32.totalorder %s156, %s170
      %p172 = scmp.eq.s32.totalorder %s22, 0
      %p173 = por %p171, %p172
      %s175 = sadd.s32 %s174, 1
      %p178 = scmp.eq.s32.totalorder %s16, 3
      %p179 = scmp.ne.s32.totalorder %s174, %s176
      %p180 = scmp.eq.s32.totalorder %s16, 0
      %p181 = por %p179, %p180
      %p182 = scmp.ne.s32.totalorder %s174, %s176
      %p183 = scmp.eq.s32.totalorder %s21, 3
      %p184 = por %p182, %p183
      %p185 = scmp.ne.s32.totalorder %s176, %s177
      %p186 = scmp.eq.s32.totalorder %s21, 0
      %p187 = por %p185, %p186
      %p188 = scmp.ne.s32.totalorder %s176, %s177
      %p189 = scmp.eq.s32.totalorder %s22, 3
      %p190 = por %p188, %p189
      %p192 = scmp.ne.s32.totalorder %s177, %s191
      %p193 = scmp.eq.s32.totalorder %s22, 0
      %p194 = por %p192, %p193
      %s195 = ssub.s32 %s23, %s35
      %s196 = ssub.s32 %s24, %s31
      %s197 = sor.u32 %s195, %s196
      %p198 = scmp.eq.s32.totalorder %s197, 0
      %s200 = sadd.s32 %s199, 1
      %s201 = scalar_select %p198, %s199, %s200
      %p204 = pneg %p198
      %p205 = scmp.eq.s32.totalorder %s16, 3
      %p206 = por %p204, %p205
      %p207 = scmp.ne.s32.totalorder %s199, %s202
      %p208 = scmp.eq.s32.totalorder %s16, 0
      %p209 = por %p207, %p208
      %p210 = scmp.ne.s32.totalorder %s199, %s202
      %p211 = scmp.eq.s32.totalorder %s21, 3
      %p212 = por %p210, %p211
      %p213 = scmp.ne.s32.totalorder %s202, %s203
      %p214 = scmp.eq.s32.totalorder %s21, 0
      %p215 = por %p213, %p214
      %p216 = scmp.ne.s32.totalorder %s202, %s203
      %p217 = scmp.eq.s32.totalorder %s22, 3
      %p218 = por %p216, %p217
      %p220 = scmp.ne.s32.totalorder %s203, %s219
      %p221 = scmp.eq.s32.totalorder %s22, 0
      %p222 = por %p220, %p221
      %p223 = scmp.le.s32.totalorder 1, %s16
      %p224 = scmp.lt.s32.totalorder %s16, 5
      %p225 = pnand %p223, %p224
      %p226 = pneg %p225
      // Predicated region
      $region9: #{tpu_custom_call.1} parent=5 // pred_check
        _
      $region10: #{tpu_custom_call.1} parent=5 // pred_check_branch
        %228 = sbr.rel (%p225) target = $region12
      $region11: #{tpu_custom_call.1} parent=5 // pred_region
        %s229 = ssub.s32 %s16, 1
        // Predicated region
        $region13: #{tpu_custom_call.1} parent=11 // pred_check
          %p230 = pneg %p103
        $region14: #{tpu_custom_call.1} parent=11 // pred_check_branch
          %232 = sbr.rel (%p230) target = $region16
        $region15: #{tpu_custom_call.1} parent=11 // pred_region
          _
        $region16: #{tpu_custom_call.1} parent=11 // pred_fallthru
          _
        // Predicated region
        $region17: #{tpu_custom_call.1} parent=11 // pred_check
          %p233 = pneg %p124
        $region18: #{tpu_custom_call.1} parent=11 // pred_check_branch
          %235 = sbr.rel (%p233) target = $region20
        $region19: #{tpu_custom_call.1} parent=11 // pred_region
          _
        $region20: #{tpu_custom_call.1} parent=11 // pred_fallthru
          _
        // Predicated region
        $region21: #{tpu_custom_call.1} parent=11 // pred_check
          %p236 = pneg %p145
        $region22: #{tpu_custom_call.1} parent=11 // pred_check_branch
          %238 = sbr.rel (%p236) target = $region24
        $region23: #{tpu_custom_call.1} parent=11 // pred_region
          _
        $region24: #{tpu_custom_call.1} parent=11 // pred_fallthru
          _
        // Predicated region
        $region25: #{tpu_custom_call.1} parent=11 // pred_check
          %p239 = pneg %p166
        $region26: #{tpu_custom_call.1} parent=11 // pred_check_branch
          %241 = sbr.rel (%p239) target = $region28
        $region27: #{tpu_custom_call.1} parent=11 // pred_region
          _
        $region28: #{tpu_custom_call.1} parent=11 // pred_fallthru
          _
        // Predicated region
        $region29: #{tpu_custom_call.1} parent=11 // pred_check
          %p242 = pneg %p187
        $region30: #{tpu_custom_call.1} parent=11 // pred_check_branch
          %244 = sbr.rel (%p242) target = $region32
        $region31: #{tpu_custom_call.1} parent=11 // pred_region
          _
        $region32: #{tpu_custom_call.1} parent=11 // pred_fallthru
          _
      $region12: #{tpu_custom_call.1} parent=5 // pred_fallthru
        _
      %p245 = scmp.lt.s32.totalorder %s16, 4
      // Predicated region
      $region33: #{tpu_custom_call.1} parent=5 // pred_check
        %p246 = pneg %p245
      $region34: #{tpu_custom_call.1} parent=5 // pred_check_branch
        %248 = sbr.rel (%p246) target = $region36
      $region35: #{tpu_custom_call.1} parent=5 // pred_region
        // Predicated region
        $region37: #{tpu_custom_call.1} parent=35 // pred_check
          %p249 = pneg %p50
        $region38: #{tpu_custom_call.1} parent=35 // pred_check_branch
          %251 = sbr.rel (%p249) target = $region40
        $region39: #{tpu_custom_call.1} parent=35 // pred_region
          %p252 = scmp.lt.s32.totalorder %s23, 1
          %s253 = scalar_select %p252, %s23, 1
          %p254 = scmp.lt.s32.totalorder %s24, 1
          %s255 = scalar_select %p254, %s24, 1
          %s256 = smul.addr %s253, 2
          %s257 = sadd.s32 %s255, %s256
          %s258 = smul.addr %s257, 2
          %s259 = scalar_lea.vmem %s0, %s258
        $region40: #{tpu_custom_call.1} parent=35 // pred_fallthru
          _
        // Predicated region
        $region41: #{tpu_custom_call.1} parent=35 // pred_check
          %p260 = pneg %p76
        $region42: #{tpu_custom_call.1} parent=35 // pred_check_branch
          %262 = sbr.rel (%p260) target = $region44
        $region43: #{tpu_custom_call.1} parent=35 // pred_region
          %p263 = scmp.lt.s32.totalorder %s23, 1
          %s264 = scalar_select %p263, %s23, 1
          %s265 = smul.addr %s264, 4
          %s266 = smul.addr %s265, 8
          %s267 = scalar_lea.vmem %s1, %s266
        $region44: #{tpu_custom_call.1} parent=35 // pred_fallthru
          _
      $region36: #{tpu_custom_call.1} parent=5 // pred_fallthru
        _
      %p268 = scmp.le.s32.totalorder 1, %s16
      %p269 = scmp.lt.s32.totalorder %s16, 5
      %p270 = pnand %p268, %p269
      %p271 = pneg %p270
      // Predicated region
      $region45: #{tpu_custom_call.1} parent=5 // pred_check
        _
      $region46: #{tpu_custom_call.1} parent=5 // pred_check_branch
        %273 = sbr.rel (%p270) target = $region48
      $region47: #{tpu_custom_call.1} parent=5 // pred_region
        %s274 = ssub.s32 %s16, 1
        %p275 = scmp.lt.s32.totalorder %s25, 1
        %s276 = scalar_select %p275, %s25, 1
        %p277 = scmp.lt.s32.totalorder %s26, 1
        %s278 = scalar_select %p277, %s26, 1
        %s279 = smul.addr %s276, 2
        %s280 = sadd.s32 %s278, %s279
        %s281 = smul.addr %s280, 2
        %s282 = scalar_lea.vmem %s0, %s281
        %p283 = pneg %p56
        %p284 = pneg %p53
        %p285 = scmp.lt.s32.totalorder %s25, 1
        %s286 = scalar_select %p285, %s25, 1
        %s287 = smul.addr %s286, 4
        %s288 = smul.addr %s287, 8
        %s289 = scalar_lea.vmem %s1, %s288
        %p290 = pneg %p82
        %p291 = pneg %p79
        %p292 = pneg %p103
        %p293 = pneg %p100
        %p294 = pneg %p124
        %p295 = pneg %p121
        %p296 = pneg %p145
        %p297 = pneg %p142
        %p298 = pneg %p166
        %p299 = pneg %p163
        %p300 = pneg %p187
        %p301 = pneg %p184
        %p302 = pneg %p215
        %p303 = pneg %p212
        %s304 = sand.u32 %s202, 1
        %s305 = scalar_lea.sflag [#allocation3], %s304
        %s306 = sand.u32 %s202, 1
        %s307 = smul.addr %s306, 2
        %s308 = scalar_lea.vmem [#allocation2], %s307
        %p309 = scmp.lt.s32.totalorder %s25, 1
        %s310 = scalar_select %p309, %s25, 1
        %p311 = scmp.lt.s32.totalorder %s26, 1
        %s312 = scalar_select %p311, %s26, 1
        %s313 = smul.addr %s310, 2
        %s314 = sadd.s32 %s312, %s313
        %s315 = smul.addr %s314, 2
        %s316 = scalar_lea.vmem %s0, %s315
        %p317 = scmp.lt.s32.totalorder %s25, 1
        %s318 = scalar_select %p317, %s25, 1
        %s319 = smul.addr %s318, 4
        %s320 = smul.addr %s319, 8
        %s321 = scalar_lea.vmem %s1, %s320
        %v322 = vld [vmem:[%s316] sm:$0x3]
        %v323 = vld [vmem:[%s2] sm:$0xff]
        %v324 = vld [vmem:[%s2 + $0x8] sm:$0xff]
        %v325 = vld [vmem:[%s2 + $0x10] sm:$0xff]
        %v326 = vld [vmem:[%s2 + $0x18] sm:$0xff]
        %328 = vset.pattern.permute.xlu0 0
        %329 = vperm.xlu0 %328, %v323
        %v330 = vpop.permute.xlu0 %329
        %333 = vset.pattern.permute.xlu0 0
        %334 = vperm.xlu0 %333, %v324
        %v335 = vpop.permute.xlu0 %334
        %338 = vset.pattern.permute.xlu0 0
        %339 = vperm.xlu0 %338, %v325
        %v340 = vpop.permute.xlu0 %339
        %343 = vset.pattern.permute.xlu0 0
        %344 = vperm.xlu0 %343, %v326
        %v345 = vpop.permute.xlu0 %344
        %v347 = vlaneseq
        %v348 = vshrl.u32 %v347, 7
        %v349 = vsub.s32 0, %v348
        %v350 = vrot.slane %v322, %v349
        %v351 = vmul.f32 %v330, %v350
        %v352 = vmul.f32 %v335, %v350
        %v353 = vmul.f32 %v340, %v350
        %v354 = vmul.f32 %v345, %v350
        %355 = vset.pattern.permute.xlu0 1
        %356 = vperm.xlu0 %355, %v323
        %v357 = vpop.permute.xlu0 %356
        %359 = vset.pattern.permute.xlu0 1
        %360 = vperm.xlu0 %359, %v324
        %v361 = vpop.permute.xlu0 %360
        %363 = vset.pattern.permute.xlu0 1
        %364 = vperm.xlu0 %363, %v325
        %v365 = vpop.permute.xlu0 %364
        %367 = vset.pattern.permute.xlu0 1
        %368 = vperm.xlu0 %367, %v326
        %v369 = vpop.permute.xlu0 %368
        %v371 = vlaneseq
        %v372 = vshrl.u32 %v371, 7
        %v373 = vsub.s32 1, %v372
        %v374 = vrot.slane %v322, %v373
        %v375 = vmul.f32 %v357, %v374
        %v376 = vmul.f32 %v361, %v374
        %v377 = vmul.f32 %v365, %v374
        %v378 = vmul.f32 %v369, %v374
        %v379 = vadd.f32 %v351, %v375
        %v380 = vadd.f32 %v352, %v376
        %v381 = vadd.f32 %v353, %v377
        %v382 = vadd.f32 %v354, %v378
        %v383 = vld [vmem:[%s321] sm:$0xff]
        %v384 = vld [vmem:[%s321 + $0x8] sm:$0xff]
        %v385 = vld [vmem:[%s321 + $0x10] sm:$0xff]
        %v386 = vld [vmem:[%s321 + $0x18] sm:$0xff]
        %388 = vset.pattern.permute.xlu0 0
        %389 = vperm.xlu0 %388, %v383
        %v390 = vpop.permute.xlu0 %389
        %393 = vset.pattern.permute.xlu0 0
        %394 = vperm.xlu0 %393, %v384
        %v395 = vpop.permute.xlu0 %394
        %398 = vset.pattern.permute.xlu0 0
        %399 = vperm.xlu0 %398, %v385
        %v400 = vpop.permute.xlu0 %399
        %403 = vset.pattern.permute.xlu0 0
        %404 = vperm.xlu0 %403, %v386
        %v405 = vpop.permute.xlu0 %404
        %v407 = vadd.f32 %v379, %v390
        %v408 = vadd.f32 %v380, %v395
        %v409 = vadd.f32 %v381, %v400
        %v410 = vadd.f32 %v382, %v405
        %v411 = vmax.f32 %v407, 0.0
        %v412 = vmax.f32 %v408, 0.0
        %v413 = vmax.f32 %v409, 0.0
        %v414 = vmax.f32 %v410, 0.0
        %v415 = vld [vmem:[%s3] sm:$0xff]
        %v416 = vld [vmem:[%s3 + $0x8] sm:$0xff]
        %v417 = vld [vmem:[%s3 + $0x10] sm:$0xff]
        %v418 = vld [vmem:[%s3 + $0x18] sm:$0xff]
        %v419 = vld [vmem:[%s4] sm:$0xff]
        %v420 = vld [vmem:[%s4 + $0x8] sm:$0xff]
        %v421 = vld [vmem:[%s4 + $0x10] sm:$0xff]
        %v422 = vld [vmem:[%s4 + $0x18] sm:$0xff]
        %424 = vset.pattern.permute.xlu0 0
        %425 = vperm.xlu0 %424, %v419
        %v426 = vpop.permute.xlu0 %425
        %429 = vset.pattern.permute.xlu0 0
        %430 = vperm.xlu0 %429, %v420
        %v431 = vpop.permute.xlu0 %430
        %434 = vset.pattern.permute.xlu0 0
        %435 = vperm.xlu0 %434, %v421
        %v436 = vpop.permute.xlu0 %435
        %439 = vset.pattern.permute.xlu0 0
        %440 = vperm.xlu0 %439, %v422
        %v441 = vpop.permute.xlu0 %440
        %vm443 = vcmask 261120
        %v445 = vsel %vm443, %v415, 0
        %v448 = vsel %vm443, %v416, 0
        %v451 = vsel %vm443, %v417, 0
        %v454 = vsel %vm443, %v418, 0
        %456 = vmatprep.subr.mxu0 0.0
        %457 = vmatpush1.msra.mxu0 %v411
        %458 = vmatprep.subr.mxu0 0.0
        %459 = vmatpush1.msra.mxu0 %v412
        %460 = vmatprep.subr.mxu0 0.0
        %461 = vmatpush1.msra.mxu0 %v413
        %462 = vmatprep.subr.mxu0 0.0
        %463 = vmatpush1.msra.mxu0 %v414
        %464 = vmatprep.subr.mxu0 0.0
        %465 = vmatpush1.msra.mxu0 0.0
        %466 = vmatprep.subr.mxu0 0.0
        %467 = vmatpush1.msra.mxu0 0.0
        %468 = vmatprep.subr.mxu0 0.0
        %469 = vmatpush1.msra.mxu0 0.0
        %470 = vmatprep.subr.mxu0 0.0
        %471 = vmatpush1.msra.mxu0 0.0
        %472 = vmatprep.subr.mxu0 0.0
        %473 = vmatpush1.msra.mxu0 0.0
        %474 = vmatprep.subr.mxu0 0.0
        %475 = vmatpush1.msra.mxu0 0.0
        %476 = vmatprep.subr.mxu0 0.0
        %477 = vmatpush1.msra.mxu0 0.0
        %478 = vmatprep.subr.mxu0 0.0
        %479 = vmatpush1.msra.mxu0 0.0
        %480 = vmatprep.subr.mxu0 0.0
        %481 = vmatpush1.msra.mxu0 0.0
        %482 = vmatprep.subr.mxu0 0.0
        %483 = vmatpush1.msra.mxu0 0.0
        %484 = vmatprep.subr.mxu0 0.0
        %485 = vmatpush1.msra.mxu0 0.0
        %486 = vmatprep.subr.mxu0 0.0
        %487 = vmatpush1.msra.mxu0 0.0
        %488 = vmatprep.subr.mxu0 0.0
        %489 = vmatpush1.msra.mxu0 0.0
        %490 = vmatprep.subr.mxu0 0.0
        %491 = vmatpush1.msra.mxu0 0.0
        %492 = vmatprep.subr.mxu0 0.0
        %493 = vmatpush1.msra.mxu0 0.0
        %494 = vmatprep.subr.mxu0 0.0
        %495 = vmatpush1.msra.mxu0 0.0
        %496 = vmatprep.subr.mxu0 0.0
        %497 = vmatpush1.msra.mxu0 0.0
        %498 = vmatprep.subr.mxu0 0.0
        %499 = vmatpush1.msra.mxu0 0.0
        %500 = vmatprep.subr.mxu0 0.0
        %501 = vmatpush1.msra.mxu0 0.0
        %502 = vmatprep.subr.mxu0 0.0
        %503 = vmatpush1.msra.mxu0 0.0
        %504 = vmatprep.subr.mxu0 0.0
        %505 = vmatpush1.msra.mxu0 0.0
        %506 = vmatprep.subr.mxu0 0.0
        %507 = vmatpush1.msra.mxu0 0.0
        %508 = vmatprep.subr.mxu0 0.0
        %509 = vmatpush1.msra.mxu0 0.0
        %510 = vmatprep.subr.mxu0 0.0
        %511 = vmatpush1.msra.mxu0 0.0
        %512 = vmatprep.subr.mxu0 0.0
        %513 = vmatpush1.msra.mxu0 0.0
        %514 = vmatprep.subr.mxu0 0.0
        %515 = vmatpush1.msra.mxu0 0.0
        %516 = vmatprep.subr.mxu0 0.0
        %517 = vmatpush1.msra.mxu0 0.0
        %518 = vmatprep.subr.mxu0 0.0
        %519 = vmatpush1.msra.mxu0 0.0
        %520 = vmatprep.mubr.f32.mxu0 0.0
        %521 = vmatmul.mubr.f32.gmra.mrb[0].mxu0 %v445
        %v522 = vpop.f32.mrb[0].mxu0
        %v523 = vadd.f32 %v426, %v522
        %v524 = vpop.f32.mrb[0].mxu0
        %525 = vmatprep.mubr.f32.mxu0 0.0
        %526 = vmatmul.mubr.f32.gmra.mrb[0].mxu0 %v448
        %v527 = vpop.f32.mrb[0].mxu0
        %v528 = vadd.f32 %v431, %v527
        %v529 = vpop.f32.mrb[0].mxu0
        %530 = vmatprep.mubr.f32.mxu0 0.0
        %531 = vmatmul.mubr.f32.gmra.mrb[0].mxu0 %v451
        %v532 = vpop.f32.mrb[0].mxu0
        %v533 = vadd.f32 %v436, %v532
        %v534 = vpop.f32.mrb[0].mxu0
        %535 = vmatprep.mubr.f32.mxu0 0.0
        %536 = vmatmul.mubr.f32.gmra.mrb[0].mxu0 %v454
        %v537 = vpop.f32.mrb[0].mxu0
        %v538 = vadd.f32 %v441, %v537
        %v539 = vpop.f32.mrb[0].mxu0
        %540 = vdwg.mxu0
        %v541 = vmax.f32 %v523, 0.0
        %v542 = vmax.f32 %v528, 0.0
        %v543 = vmax.f32 %v533, 0.0
        %v544 = vmax.f32 %v538, 0.0
        %v545 = vld [vmem:[%s5] sm:$0x3]
        %v546 = vld [vmem:[%s6] sm:$0x3]
        %548 = vset.pattern.permute.xlu0 0
        %549 = vperm.xlu0 %548, %v546
        %v550 = vpop.permute.xlu0 %549
        %v553 = vsel %vm443, %v545, 0
        %555 = vmatprep.subr.mxu0 0.0
        %556 = vmatpush1.msra.mxu0 %v541
        %557 = vmatprep.subr.mxu0 0.0
        %558 = vmatpush1.msra.mxu0 %v542
        %559 = vmatprep.subr.mxu0 0.0
        %560 = vmatpush1.msra.mxu0 %v543
        %561 = vmatprep.subr.mxu0 0.0
        %562 = vmatpush1.msra.mxu0 %v544
        %563 = vmatprep.subr.mxu0 0.0
        %564 = vmatpush1.msra.mxu0 0.0
        %565 = vmatprep.subr.mxu0 0.0
        %566 = vmatpush1.msra.mxu0 0.0
        %567 = vmatprep.subr.mxu0 0.0
        %568 = vmatpush1.msra.mxu0 0.0
        %569 = vmatprep.subr.mxu0 0.0
        %570 = vmatpush1.msra.mxu0 0.0
        %571 = vmatprep.subr.mxu0 0.0
        %572 = vmatpush1.msra.mxu0 0.0
        %573 = vmatprep.subr.mxu0 0.0
        %574 = vmatpush1.msra.mxu0 0.0
        %575 = vmatprep.subr.mxu0 0.0
        %576 = vmatpush1.msra.mxu0 0.0
        %577 = vmatprep.subr.mxu0 0.0
        %578 = vmatpush1.msra.mxu0 0.0
        %579 = vmatprep.subr.mxu0 0.0
        %580 = vmatpush1.msra.mxu0 0.0
        %581 = vmatprep.subr.mxu0 0.0
        %582 = vmatpush1.msra.mxu0 0.0
        %583 = vmatprep.subr.mxu0 0.0
        %584 = vmatpush1.msra.mxu0 0.0
        %585 = vmatprep.subr.mxu0 0.0
        %586 = vmatpush1.msra.mxu0 0.0
        %587 = vmatprep.subr.mxu0 0.0
        %588 = vmatpush1.msra.mxu0 0.0
        %589 = vmatprep.subr.mxu0 0.0
        %590 = vmatpush1.msra.mxu0 0.0
        %591 = vmatprep.subr.mxu0 0.0
        %592 = vmatpush1.msra.mxu0 0.0
        %593 = vmatprep.subr.mxu0 0.0
        %594 = vmatpush1.msra.mxu0 0.0
        %595 = vmatprep.subr.mxu0 0.0
        %596 = vmatpush1.msra.mxu0 0.0
        %597 = vmatprep.subr.mxu0 0.0
        %598 = vmatpush1.msra.mxu0 0.0
        %599 = vmatprep.subr.mxu0 0.0
        %600 = vmatpush1.msra.mxu0 0.0
        %601 = vmatprep.subr.mxu0 0.0
        %602 = vmatpush1.msra.mxu0 0.0
        %603 = vmatprep.subr.mxu0 0.0
        %604 = vmatpush1.msra.mxu0 0.0
        %605 = vmatprep.subr.mxu0 0.0
        %606 = vmatpush1.msra.mxu0 0.0
        %607 = vmatprep.subr.mxu0 0.0
        %608 = vmatpush1.msra.mxu0 0.0
        %609 = vmatprep.subr.mxu0 0.0
        %610 = vmatpush1.msra.mxu0 0.0
        %611 = vmatprep.subr.mxu0 0.0
        %612 = vmatpush1.msra.mxu0 0.0
        %613 = vmatprep.subr.mxu0 0.0
        %614 = vmatpush1.msra.mxu0 0.0
        %615 = vmatprep.subr.mxu0 0.0
        %616 = vmatpush1.msra.mxu0 0.0
        %617 = vmatprep.subr.mxu0 0.0
        %618 = vmatpush1.msra.mxu0 0.0
        %619 = vmatprep.mubr.f32.mxu0 0.0
        %620 = vmatmul.mubr.f32.gmra.mrb[0].mxu0 %v553
        %v621 = vpop.f32.mrb[0].mxu0
        %v622 = vadd.f32 %v550, %v621
        %v623 = vpop.f32.mrb[0].mxu0
        %624 = vdwg.mxu0
        %v625 = vtanh.pop %v622
        %626 = vst [vmem:[%s308] sm:$0x3] %v625
        %s627 = sand.u32 %s202, 1
        %s628 = scalar_lea.sflag [#allocation3], %s627
        %s629 = sand.u32 %s202, 1
        %s630 = smul.addr %s629, 2
        %s631 = scalar_lea.vmem [#allocation2], %s630
        // Predicated region
        $region49: #{tpu_custom_call.1} parent=47 // pred_check
          %p632 = pneg %p212
        $region50: #{tpu_custom_call.1} parent=47 // pred_check_branch
          %634 = sbr.rel (%p632) target = $region52
        $region51: #{tpu_custom_call.1} parent=47 // pred_region
          %s636 = ssub.s32 32, 32
          %637 = vsyncadd %s628, %s636
          %s638 = smul.addr %s25, 2
          %s639 = sadd.s32 %s26, %s638
          %s640 = smul.addr %s639, 32
          %s641 = scalar_lea.hbm %s7, %s640
          %s643 = sshll.u32 %s631, 4
          %s644 = int_to_ptr.vmem [resolvable:$true] %s643
          %646 = dma.vmem_to_hbm [thread:$0]  %s644, 32, %s641, %s628
        $region52: #{tpu_custom_call.1} parent=47 // pred_fallthru
          _
      $region48: #{tpu_custom_call.1} parent=5 // pred_fallthru
        _
      %p647 = scmp.le.s32.totalorder 2, %s16
      // Predicated region
      $region53: #{tpu_custom_call.1} parent=5 // pred_check
        %p648 = pneg %p647
      $region54: #{tpu_custom_call.1} parent=5 // pred_check_branch
        %650 = sbr.rel (%p648) target = $region56
      $region55: #{tpu_custom_call.1} parent=5 // pred_region
        %s651 = ssub.s32 %s16, 2
        // Predicated region
        $region57: #{tpu_custom_call.1} parent=55 // pred_check
          %p652 = pneg %p218
        $region58: #{tpu_custom_call.1} parent=55 // pred_check_branch
          %654 = sbr.rel (%p652) target = $region60
        $region59: #{tpu_custom_call.1} parent=55 // pred_region
          %s655 = sand.u32 %s203, 1
          %s656 = scalar_lea.sflag [#allocation3], %s655
          %s657 = sand.u32 %s203, 1
          %s658 = smul.addr %s657, 2
          %s659 = scalar_lea.vmem [#allocation2], %s658
          %660 = dma.done %s656, 32
        $region60: #{tpu_custom_call.1} parent=55 // pred_fallthru
          _
      $region56: #{tpu_custom_call.1} parent=5 // pred_fallthru
        _
    $region6: #{tpu_custom_call.1} parent=1 // loop_footer
      %s20 = sadd.s32 1, %s16
    $region7: #{tpu_custom_call.1} parent=1 // loop_footer_branch
      %15 = sbr.rel target = $region3
    $region8: #{tpu_custom_call.1} parent=1 // loop_exit
      _
    %661 = vsyncpa [#allocation3], 1
    %s662 = scalar_lea.sflag [#allocation3], 1
    %663 = vsyncpa %s662, 1

</llo_original>
